<compile_context>
chip_gen: v6e
topology: v6e:2x2x1
jax: 0.10.0
libtpu: 0.0.40
codegen_flags: <defaults>
</compile_context>

<pallas_src>
import math

import jax
import jax.numpy as jnp
from jax.experimental import pallas as pl
from jax.experimental.pallas import tpu as pltpu

# Logical sizes.
K_IN, H1, H2, N_OUT = 28 * 28, 120, 80, 10
# Lane-padded hidden/output sizes (multiples of 128). K is NOT padded.
H1_PAD, H2_PAD, OUT_PAD = 128, 128, 128


def _round_up(x, m):
    return ((x + m - 1) // m) * m


def mlp_kernel(x_ref, w1_ref, b1_ref, w2_ref, b2_ref, w3_ref, b3_ref, o_ref):
    # x tile: (TB, 784) f32 straight from HBM (no wrapper pad/cast pass).
    x = x_ref[...]
    # fc1 in f32 (tight accuracy; free since the kernel is HBM-bound on x).
    h1 = jnp.dot(x, w1_ref[...], preferred_element_type=jnp.float32) + b1_ref[...]
    h1 = jnp.maximum(h1, 0.0).astype(jnp.bfloat16)
    # fc2 / fc3: bf16 inputs, f32 accumulation, f32 bias-add / ReLU.
    h2 = jnp.dot(h1, w2_ref[...], preferred_element_type=jnp.float32) + b2_ref[...]
    h2 = jnp.maximum(h2, 0.0).astype(jnp.bfloat16)
    o_ref[...] = (
        jnp.dot(h2, w3_ref[...], preferred_element_type=jnp.float32) + b3_ref[...]
    ).astype(o_ref.dtype)  # bf16 writeback, f32 math above


def pack_params(params):
    """Zero-pad params to 128 output lanes. w1 stays f32; w2/w3 -> bf16; biases f32."""
    w1, b1, w2, b2, w3, b3 = params

    def pad_w(w, rows, cols, dtype):
        out = jnp.zeros((rows, cols), jnp.float32)
        return out.at[: w.shape[0], : w.shape[1]].set(w).astype(dtype)

    def pad_b(b, cols):
        return jnp.zeros((1, cols), jnp.float32).at[:, : b.shape[1]].set(b)

    return (
        pad_w(w1, K_IN, H1_PAD, jnp.float32),
        pad_b(b1, H1_PAD),
        pad_w(w2, H1_PAD, H2_PAD, jnp.bfloat16),
        pad_b(b2, H2_PAD),
        pad_w(w3, H2_PAD, OUT_PAD, jnp.bfloat16),
        pad_b(b3, OUT_PAD),
    )


def mlp_forward(x, packed_params, *, tb=1024):
    w1, b1, w2, b2, w3, b3 = packed_params
    B = x.shape[0]

    # Flatten NCHW -> (B, 784). Contiguous reshape: no data movement, no cast.
    x2d = x.reshape(B, K_IN)

    # Batch tile: up to 1024 rows (multiple of 256, amortizes per-step overhead);
    # tiny demo batches just round up to a sublane multiple.
    TB = min(tb, _round_up(B, 8))
    # v7x megacore: keep >= 2 grid steps for moderate/large batches so both
    # TensorCores get a share of the mem-bound stream.
    if B >= 512 and _round_up(B, TB) // TB < 2:
        TB = _round_up((B + 1) // 2, 256)
    B_pad = _round_up(B, TB)
    if B_pad != B:
        x2d = jnp.pad(x2d, ((0, B_pad - B), (0, 0)))
    grid = (B_pad // TB,)

    const = lambda i: (0, 0)  # weights/biases: fetched once, resident in VMEM
    in_specs = [
        pl.BlockSpec((TB, K_IN), lambda i: (i, 0)),   # x streamed per batch tile
        pl.BlockSpec((K_IN, H1_PAD), const),
        pl.BlockSpec((1, H1_PAD), const),
        pl.BlockSpec((H1_PAD, H2_PAD), const),
        pl.BlockSpec((1, H2_PAD), const),
        pl.BlockSpec((H2_PAD, OUT_PAD), const),
        pl.BlockSpec((1, OUT_PAD), const),
    ]
    out_spec = pl.BlockSpec((TB, OUT_PAD), lambda i: (i, 0))  # lane-dense bf16 output

    flops = 2 * B_pad * (K_IN * H1_PAD + H1_PAD * H2_PAD + H2_PAD * OUT_PAD)
    bytes_accessed = (
        x2d.size * x2d.dtype.itemsize
        + w1.size * 4 + w2.size * 2 + w3.size * 2
        + (b1.size + b2.size + b3.size) * 4
        + B_pad * OUT_PAD * 2
    )

    out = pl.pallas_call(
        mlp_kernel,
        out_shape=jax.ShapeDtypeStruct((B_pad, OUT_PAD), jnp.bfloat16),
        grid=grid,
        in_specs=in_specs,
        out_specs=out_spec,
        compiler_params=pltpu.CompilerParams(
            dimension_semantics=("parallel",),       # shard batch across TCs on v7x
            vmem_limit_bytes=32 * 1024 * 1024,       # few-MiB usage; safe on v5e/v6e/v7x
        ),
        cost_estimate=pl.CostEstimate(
            flops=flops, transcendentals=0, bytes_accessed=bytes_accessed
        ),
    )(x2d, w1, b1, w2, b2, w3, b3)

    return out[:B, :N_OUT].astype(jnp.float32)


def init_params(key):
    # Deterministic init mirroring nn.Linear's default: U(-1/sqrt(fan_in), 1/sqrt(fan_in))
    # for both weight and bias. Weights stored as (in, out).
    dims = [(K_IN, H1), (H1, H2), (H2, N_OUT)]
    params = []
    for fan_in, fan_out in dims:
        key, kw, kb = jax.random.split(key, 3)
        bound = 1.0 / math.sqrt(fan_in)
        w = jax.random.uniform(kw, (fan_in, fan_out), jnp.float32, -bound, bound)
        b = jax.random.uniform(kb, (1, fan_out), jnp.float32, -bound, bound)
        params.extend([w, b])
    return tuple(params)


def mlp_reference(x, params):
    # Pure-JAX f32 reference for correctness check.
    w1, b1, w2, b2, w3, b3 = params
    h = x.reshape(x.shape[0], -1)
    h = jnp.maximum(h @ w1 + b1, 0.0)
    h = jnp.maximum(h @ w2 + b2, 0.0)
    return h @ w3 + b3


if __name__ == "__main__":
    key = jax.random.PRNGKey(0)
    kp, kx = jax.random.split(key)
    params = init_params(kp)
    packed = pack_params(params)

    B = 8
    x = jax.random.normal(kx, (B, 1, 28, 28), jnp.float32)

    out = mlp_forward(x, packed)
    out = jax.block_until_ready(out)

    ref = mlp_reference(x, params)
    assert out.shape == (B, N_OUT)
    # fc1 is f32; only h1/h2 activations, fc2/fc3 weights and the output are
    # bf16 (with f32 accumulation), so error stays at the ~1e-2 level.
    assert jnp.allclose(out, ref, atol=3e-2, rtol=3e-2), "mismatch vs reference"

    print("KERNEL_OK")
</pallas_src>

<mosaic_0001>
module attributes {stable_mosaic.version = 11 : i64} {
  func.func @mlp_kernel(%arg0: i32, %arg1: memref<8x784xf32, #tpu.memory_space<vmem>>, %arg2: memref<784x128xf32, #tpu.memory_space<vmem>>, %arg3: memref<1x128xf32, #tpu.memory_space<vmem>>, %arg4: memref<128x128xbf16, #tpu.memory_space<vmem>>, %arg5: memref<1x128xf32, #tpu.memory_space<vmem>>, %arg6: memref<128x128xbf16, #tpu.memory_space<vmem>>, %arg7: memref<1x128xf32, #tpu.memory_space<vmem>>, %arg8: memref<8x128xbf16, #tpu.memory_space<vmem>>) attributes {dimension_semantics = [#tpu.dimension_semantics<parallel>], iteration_bounds = array<i64: 1>, scalar_prefetch = 0 : i64, scratch_operands = 0 : i64, tpu.core_type = #tpu.core_type<tc>, window_params = [{transform_indices = @transform_0, window_bounds = array<i64: 8, 784>}, {pipeline_mode = #tpu.pipeline_mode<synchronous>, transform_indices = @transform_1, window_bounds = array<i64: 784, 128>}, {pipeline_mode = #tpu.pipeline_mode<synchronous>, transform_indices = @transform_2, window_bounds = array<i64: 1, 128>}, {pipeline_mode = #tpu.pipeline_mode<synchronous>, transform_indices = @transform_3, window_bounds = array<i64: 128, 128>}, {pipeline_mode = #tpu.pipeline_mode<synchronous>, transform_indices = @transform_4, window_bounds = array<i64: 1, 128>}, {pipeline_mode = #tpu.pipeline_mode<synchronous>, transform_indices = @transform_5, window_bounds = array<i64: 128, 128>}, {pipeline_mode = #tpu.pipeline_mode<synchronous>, transform_indices = @transform_6, window_bounds = array<i64: 1, 128>}, {transform_indices = @transform_7, window_bounds = array<i64: 8, 128>}]} {
    %c0 = arith.constant 0 : index
    %c0_0 = arith.constant 0 : index
    %0 = vector.load %arg1[%c0, %c0_0] : memref<8x784xf32, #tpu.memory_space<vmem>>, vector<8x784xf32>
    %c0_1 = arith.constant 0 : index
    %c0_2 = arith.constant 0 : index
    %1 = vector.load %arg2[%c0_1, %c0_2] : memref<784x128xf32, #tpu.memory_space<vmem>>, vector<784x128xf32>
    %cst = arith.constant dense<0.000000e+00> : vector<8x128xf32>
    %2 = tpu.matmul %0, %1, %cst {dimension_numbers = #tpu.dot_dimension_numbers<[1], [0], [0], [1], [0, 0, 1, 1], [], []>} : vector<8x784xf32>, vector<784x128xf32>, vector<8x128xf32> -> vector<8x128xf32>
    %c0_3 = arith.constant 0 : index
    %c0_4 = arith.constant 0 : index
    %3 = vector.load %arg3[%c0_3, %c0_4] : memref<1x128xf32, #tpu.memory_space<vmem>>, vector<1x128xf32>
    %4 = vector.broadcast %3 : vector<1x128xf32> to vector<8x128xf32>
    %5 = arith.addf %2, %4 : vector<8x128xf32>
    %cst_5 = arith.constant 0.000000e+00 : f32
    %6 = vector.broadcast %cst_5 : f32 to vector<8x128xf32>
    %7 = arith.maximumf %5, %6 : vector<8x128xf32>
    %8 = arith.truncf %7 : vector<8x128xf32> to vector<8x128xbf16>
    %c0_6 = arith.constant 0 : index
    %c0_7 = arith.constant 0 : index
    %9 = vector.load %arg4[%c0_6, %c0_7] : memref<128x128xbf16, #tpu.memory_space<vmem>>, vector<128x128xbf16>
    %cst_8 = arith.constant dense<0.000000e+00> : vector<8x128xf32>
    %10 = tpu.matmul %8, %9, %cst_8 {dimension_numbers = #tpu.dot_dimension_numbers<[1], [0], [0], [1], [0, 0, 1, 1], [], []>} : vector<8x128xbf16>, vector<128x128xbf16>, vector<8x128xf32> -> vector<8x128xf32>
    %c0_9 = arith.constant 0 : index
    %c0_10 = arith.constant 0 : index
    %11 = vector.load %arg5[%c0_9, %c0_10] : memref<1x128xf32, #tpu.memory_space<vmem>>, vector<1x128xf32>
    %12 = vector.broadcast %11 : vector<1x128xf32> to vector<8x128xf32>
    %13 = arith.addf %10, %12 : vector<8x128xf32>
    %cst_11 = arith.constant 0.000000e+00 : f32
    %14 = vector.broadcast %cst_11 : f32 to vector<8x128xf32>
    %15 = arith.maximumf %13, %14 : vector<8x128xf32>
    %16 = arith.truncf %15 : vector<8x128xf32> to vector<8x128xbf16>
    %c0_12 = arith.constant 0 : index
    %c0_13 = arith.constant 0 : index
    %17 = vector.load %arg6[%c0_12, %c0_13] : memref<128x128xbf16, #tpu.memory_space<vmem>>, vector<128x128xbf16>
    %cst_14 = arith.constant dense<0.000000e+00> : vector<8x128xf32>
    %18 = tpu.matmul %16, %17, %cst_14 {dimension_numbers = #tpu.dot_dimension_numbers<[1], [0], [0], [1], [0, 0, 1, 1], [], []>} : vector<8x128xbf16>, vector<128x128xbf16>, vector<8x128xf32> -> vector<8x128xf32>
    %c0_15 = arith.constant 0 : index
    %c0_16 = arith.constant 0 : index
    %19 = vector.load %arg7[%c0_15, %c0_16] : memref<1x128xf32, #tpu.memory_space<vmem>>, vector<1x128xf32>
    %20 = vector.broadcast %19 : vector<1x128xf32> to vector<8x128xf32>
    %21 = arith.addf %18, %20 : vector<8x128xf32>
    %22 = arith.truncf %21 : vector<8x128xf32> to vector<8x128xbf16>
    %c0_17 = arith.constant 0 : index
    %c0_18 = arith.constant 0 : index
    %23 = vector.load %arg8[%c0_17, %c0_18] : memref<8x128xbf16, #tpu.memory_space<vmem>>, vector<8x128xbf16>
    tpu.vector_store %arg8[%c0_17, %c0_18], %22 {strides = array<i32>} : memref<8x128xbf16, #tpu.memory_space<vmem>>, vector<8x128xbf16>,
    return
  }
  func.func @transform_0(%arg0: i32) -> (i32, i32) {
    %c0_i32 = arith.constant 0 : i32
    %c0_i32_0 = arith.constant 0 : i32
    return %arg0, %c0_i32 : i32, i32
  }
  func.func @transform_1(%arg0: i32) -> (i32, i32) {
    %c0_i32 = arith.constant 0 : i32
    %c0_i32_0 = arith.constant 0 : i32
    %c0_i32_1 = arith.constant 0 : i32
    return %c0_i32, %c0_i32_0 : i32, i32
  }
  func.func @transform_2(%arg0: i32) -> (i32, i32) {
    %c0_i32 = arith.constant 0 : i32
    %c0_i32_0 = arith.constant 0 : i32
    %c0_i32_1 = arith.constant 0 : i32
    return %c0_i32, %c0_i32_0 : i32, i32
  }
  func.func @transform_3(%arg0: i32) -> (i32, i32) {
    %c0_i32 = arith.constant 0 : i32
    %c0_i32_0 = arith.constant 0 : i32
    %c0_i32_1 = arith.constant 0 : i32
    return %c0_i32, %c0_i32_0 : i32, i32
  }
  func.func @transform_4(%arg0: i32) -> (i32, i32) {
    %c0_i32 = arith.constant 0 : i32
    %c0_i32_0 = arith.constant 0 : i32
    %c0_i32_1 = arith.constant 0 : i32
    return %c0_i32, %c0_i32_0 : i32, i32
  }
  func.func @transform_5(%arg0: i32) -> (i32, i32) {
    %c0_i32 = arith.constant 0 : i32
    %c0_i32_0 = arith.constant 0 : i32
    %c0_i32_1 = arith.constant 0 : i32
    return %c0_i32, %c0_i32_0 : i32, i32
  }
  func.func @transform_6(%arg0: i32) -> (i32, i32) {
    %c0_i32 = arith.constant 0 : i32
    %c0_i32_0 = arith.constant 0 : i32
    %c0_i32_1 = arith.constant 0 : i32
    return %c0_i32, %c0_i32_0 : i32, i32
  }
  func.func @transform_7(%arg0: i32) -> (i32, i32) {
    %c0_i32 = arith.constant 0 : i32
    %c0_i32_0 = arith.constant 0 : i32
    return %arg0, %c0_i32 : i32, i32
  }
}

</mosaic_0001>

<llo_original>
// kernel: tpu_custom_call.1
$region0: #{tpu_custom_call.1}
  #allocation0 [shape = 'u32[]', space=smem, size = 0x4, offset = 0x4, fixed_abs, tag = 'smem constant byte address 0x4 - core index']
  #allocation1 [shape = 'u32[144,128]{1,0:T(1,128)}', space=vmem, size = 0x12000, scoped, tag = 'internal scratch']
  %s0 = inlined_call_operand.hbm [shape: f32[8,784], index: 0, kind: input, shape index: {}]
  %s1 = inlined_call_operand.hbm [shape: f32[784,128], index: 1, kind: input, shape index: {}]
  %s2 = inlined_call_operand.vmem [shape: f32[1,128], index: 2, kind: input, shape index: {}]
  %s3 = inlined_call_operand.hbm [shape: bf16[128,128], index: 3, kind: input, shape index: {}]
  %s4 = inlined_call_operand.vmem [shape: f32[1,128], index: 4, kind: input, shape index: {}]
  %s5 = inlined_call_operand.hbm [shape: bf16[128,128], index: 5, kind: input, shape index: {}]
  %s6 = inlined_call_operand.vmem [shape: f32[1,128], index: 6, kind: input, shape index: {}]
  %s7 = inlined_call_operand.hbm [shape: bf16[8,128], index: 7, kind: output, shape index: {}]
  %s8 = sld [smem:[#allocation0]]
  $region54: #{tpu_custom_call.1} parent=0
    _
  %s10 = ssub.s32 1, %s8
  %s11 = scalar_select 0, %s10, %s8
  $region1: #{tpu_custom_call.1} parent=0
    #allocation2 [shape = 'u8[28672]{0}', space=vmem, size = 0x7000, scoped, tag = 'input window, operand 0, single buffered']
    #allocation3 [shape = 's32[1]{0}', space=sflag, size = 0x4, scoped, tag = 'scoped memory for tpu_custom_call.1']
    #allocation4 [shape = 's32[1]{0}', space=sflag, size = 0x4, scoped, tag = 'scoped memory for tpu_custom_call.1']
    #allocation5 [shape = 'u8[401408]{0}', space=vmem, size = 0x62000, scoped, tag = 'input window, operand 1, single buffered']
    #allocation6 [shape = 's32[1]{0}', space=sflag, size = 0x4, scoped, tag = 'scoped memory for tpu_custom_call.1']
    #allocation7 [shape = 'u8[32768]{0}', space=vmem, size = 0x8000, scoped, tag = 'input window, operand 3, single buffered']
    #allocation8 [shape = 'u8[32768]{0}', space=vmem, size = 0x8000, scoped, tag = 'input window, operand 5, single buffered']
    #allocation9 [shape = 's32[1]{0}', space=sflag, size = 0x4, scoped, tag = 'scoped memory for tpu_custom_call.1']
    #allocation10 [shape = 'u8[2048]{0}', space=vmem, size = 0x800, scoped, tag = 'output window, operand 0, single buffered']
    %12 = vsyncpa [#allocation3], 0
    %13 = vsyncpa [#allocation6], 0
    %14 = vsyncpa [#allocation9], 0
    %15 = vsyncpa [#allocation4], 0
    // Predicated region
    $region2: #{tpu_custom_call.1} parent=1 // pred_check
      _
    $region3: #{tpu_custom_call.1} parent=1 // pred_check_branch
      %17 = sbr.rel (0) target = $region5
    $region4: #{tpu_custom_call.1} parent=1 // pred_region
      %s19 = ssub.s32 896, 896
      %20 = vsyncadd [#allocation3], %s19
      %s22 = sshll.u32 [#allocation2], 4
      %s23 = int_to_ptr.vmem [resolvable:$true] %s22
      %25 = dma.hbm_to_vmem [thread:$0]  %s0, 896, %s23, [#allocation3]
    $region5: #{tpu_custom_call.1} parent=1 // pred_fallthru
      _
    // Predicated region
    $region6: #{tpu_custom_call.1} parent=1 // pred_check
      _
    $region7: #{tpu_custom_call.1} parent=1 // pred_check_branch
      %27 = sbr.rel (0) target = $region9
    $region8: #{tpu_custom_call.1} parent=1 // pred_region
      %s29 = ssub.s32 12544, 12544
      %30 = vsyncadd [#allocation6], %s29
      %s31 = sshll.u32 [#allocation5], 4
      %s32 = int_to_ptr.vmem [resolvable:$true] %s31
      %37 = dma.hbm_to_vmem [thread:$0]  %s1, 12544, %s32, [#allocation6], 128, 128, 8
    $region9: #{tpu_custom_call.1} parent=1 // pred_fallthru
      _
    // Predicated region
    $region10: #{tpu_custom_call.1} parent=1 // pred_check
      _
    $region11: #{tpu_custom_call.1} parent=1 // pred_check_branch
      %39 = sbr.rel (0) target = $region13
    $region12: #{tpu_custom_call.1} parent=1 // pred_region
      _
    $region13: #{tpu_custom_call.1} parent=1 // pred_fallthru
      _
    // Predicated region
    $region14: #{tpu_custom_call.1} parent=1 // pred_check
      _
    $region15: #{tpu_custom_call.1} parent=1 // pred_check_branch
      %41 = sbr.rel (0) target = $region17
    $region16: #{tpu_custom_call.1} parent=1 // pred_region
      %s43 = ssub.s32 1024, 1024
      %44 = vsyncadd [#allocation6], %s43
      %s45 = sshll.u32 [#allocation7], 4
      %s46 = int_to_ptr.vmem [resolvable:$true] %s45
      %51 = dma.hbm_to_vmem [thread:$0]  %s3, 1024, %s46, [#allocation6], 64, 64, 4
    $region17: #{tpu_custom_call.1} parent=1 // pred_fallthru
      _
    // Predicated region
    $region18: #{tpu_custom_call.1} parent=1 // pred_check
      _
    $region19: #{tpu_custom_call.1} parent=1 // pred_check_branch
      %53 = sbr.rel (0) target = $region21
    $region20: #{tpu_custom_call.1} parent=1 // pred_region
      _
    $region21: #{tpu_custom_call.1} parent=1 // pred_fallthru
      _
    // Predicated region
    $region22: #{tpu_custom_call.1} parent=1 // pred_check
      _
    $region23: #{tpu_custom_call.1} parent=1 // pred_check_branch
      %55 = sbr.rel (0) target = $region25
    $region24: #{tpu_custom_call.1} parent=1 // pred_region
      %s57 = ssub.s32 1024, 1024
      %58 = vsyncadd [#allocation9], %s57
      %s59 = sshll.u32 [#allocation8], 4
      %s60 = int_to_ptr.vmem [resolvable:$true] %s59
      %65 = dma.hbm_to_vmem [thread:$0]  %s5, 1024, %s60, [#allocation9], 64, 64, 4
    $region25: #{tpu_custom_call.1} parent=1 // pred_fallthru
      _
    // Predicated region
    $region26: #{tpu_custom_call.1} parent=1 // pred_check
      _
    $region27: #{tpu_custom_call.1} parent=1 // pred_check_branch
      %67 = sbr.rel (0) target = $region29
    $region28: #{tpu_custom_call.1} parent=1 // pred_region
      _
    $region29: #{tpu_custom_call.1} parent=1 // pred_fallthru
      _
    // Predicated region
    $region30: #{tpu_custom_call.1} parent=1 // pred_check
      _
    $region31: #{tpu_custom_call.1} parent=1 // pred_check_branch
      %69 = sbr.rel (0) target = $region33
    $region32: #{tpu_custom_call.1} parent=1 // pred_region
      %70 = dma.done [#allocation3], 896
    $region33: #{tpu_custom_call.1} parent=1 // pred_fallthru
      _
    // Predicated region
    $region34: #{tpu_custom_call.1} parent=1 // pred_check
      _
    $region35: #{tpu_custom_call.1} parent=1 // pred_check_branch
      %72 = sbr.rel (0) target = $region37
    $region36: #{tpu_custom_call.1} parent=1 // pred_region
      %73 = dma.done [#allocation6], 12544
    $region37: #{tpu_custom_call.1} parent=1 // pred_fallthru
      _
    // Predicated region
    $region38: #{tpu_custom_call.1} parent=1 // pred_check
      _
    $region39: #{tpu_custom_call.1} parent=1 // pred_check_branch
      %75 = sbr.rel (0) target = $region41
    $region40: #{tpu_custom_call.1} parent=1 // pred_region
      %76 = dma.done [#allocation6], 1024
    $region41: #{tpu_custom_call.1} parent=1 // pred_fallthru
      _
    // Predicated region
    $region42: #{tpu_custom_call.1} parent=1 // pred_check
      _
    $region43: #{tpu_custom_call.1} parent=1 // pred_check_branch
      %78 = sbr.rel (0) target = $region45
    $region44: #{tpu_custom_call.1} parent=1 // pred_region
      %79 = dma.done [#allocation9], 1024
    $region45: #{tpu_custom_call.1} parent=1 // pred_fallthru
      _
    %v81 = vld [vmem:[#allocation2] sm:$0xff]
    %v82 = vld [vmem:[#allocation2 + $0x8] sm:$0xff]
    %v83 = vld [vmem:[#allocation2 + $0x10] sm:$0xff]
    %v84 = vld [vmem:[#allocation2 + $0x18] sm:$0xff]
    %v85 = vld [vmem:[#allocation2 + $0x20] sm:$0xff]
    %v86 = vld [vmem:[#allocation2 + $0x28] sm:$0xff]
    %v87 = vld [vmem:[#allocation2 + $0x30] sm:$0xff]
    %v88 = vld [vmem:[#allocation5] sm:$0xff]
    %v89 = vld [vmem:[#allocation5 + $0x8] sm:$0xff]
    %v90 = vld [vmem:[#allocation5 + $0x10] sm:$0xff]
    %v91 = vld [vmem:[#allocation5 + $0x18] sm:$0xff]
    %v92 = vld [vmem:[#allocation5 + $0x20] sm:$0xff]
    %v93 = vld [vmem:[#allocation5 + $0x28] sm:$0xff]
    %v94 = vld [vmem:[#allocation5 + $0x30] sm:$0xff]
    %v95 = vld [vmem:[#allocation5 + $0x38] sm:$0xff]
    %v96 = vld [vmem:[#allocation5 + $0x40] sm:$0xff]
    %v97 = vld [vmem:[#allocation5 + $0x48] sm:$0xff]
    %v98 = vld [vmem:[#allocation5 + $0x50] sm:$0xff]
    %v99 = vld [vmem:[#allocation5 + $0x58] sm:$0xff]
    %v100 = vld [vmem:[#allocation5 + $0x60] sm:$0xff]
    %v101 = vld [vmem:[#allocation5 + $0x68] sm:$0xff]
    %v102 = vld [vmem:[#allocation5 + $0x70] sm:$0xff]
    %v103 = vld [vmem:[#allocation5 + $0x78] sm:$0xff]
    %v104 = vld [vmem:[#allocation5 + $0x80] sm:$0xff]
    %v105 = vld [vmem:[#allocation5 + $0x88] sm:$0xff]
    %v106 = vld [vmem:[#allocation5 + $0x90] sm:$0xff]
    %v107 = vld [vmem:[#allocation5 + $0x98] sm:$0xff]
    %v108 = vld [vmem:[#allocation5 + $0xa0] sm:$0xff]
    %v109 = vld [vmem:[#allocation5 + $0xa8] sm:$0xff]
    %v110 = vld [vmem:[#allocation5 + $0xb0] sm:$0xff]
    %v111 = vld [vmem:[#allocation5 + $0xb8] sm:$0xff]
    %v112 = vld [vmem:[#allocation5 + $0xc0] sm:$0xff]
    %v113 = vld [vmem:[#allocation5 + $0xc8] sm:$0xff]
    %v114 = vld [vmem:[#allocation5 + $0xd0] sm:$0xff]
    %v115 = vld [vmem:[#allocation5 + $0xd8] sm:$0xff]
    %v116 = vld [vmem:[#allocation5 + $0xe0] sm:$0xff]
    %v117 = vld [vmem:[#allocation5 + $0xe8] sm:$0xff]
    %v118 = vld [vmem:[#allocation5 + $0xf0] sm:$0xff]
    %v119 = vld [vmem:[#allocation5 + $0xf8] sm:$0xff]
    %v120 = vld [vmem:[#allocation5 + $0x100] sm:$0xff]
    %v121 = vld [vmem:[#allocation5 + $0x108] sm:$0xff]
    %v122 = vld [vmem:[#allocation5 + $0x110] sm:$0xff]
    %v123 = vld [vmem:[#allocation5 + $0x118] sm:$0xff]
    %v124 = vld [vmem:[#allocation5 + $0x120] sm:$0xff]
    %v125 = vld [vmem:[#allocation5 + $0x128] sm:$0xff]
    %v126 = vld [vmem:[#allocation5 + $0x130] sm:$0xff]
    %v127 = vld [vmem:[#allocation5 + $0x138] sm:$0xff]
    %v128 = vld [vmem:[#allocation5 + $0x140] sm:$0xff]
    %v129 = vld [vmem:[#allocation5 + $0x148] sm:$0xff]
    %v130 = vld [vmem:[#allocation5 + $0x150] sm:$0xff]
    %v131 = vld [vmem:[#allocation5 + $0x158] sm:$0xff]
    %v132 = vld [vmem:[#allocation5 + $0x160] sm:$0xff]
    %v133 = vld [vmem:[#allocation5 + $0x168] sm:$0xff]
    %v134 = vld [vmem:[#allocation5 + $0x170] sm:$0xff]
    %v135 = vld [vmem:[#allocation5 + $0x178] sm:$0xff]
    %v136 = vld [vmem:[#allocation5 + $0x180] sm:$0xff]
    %v137 = vld [vmem:[#allocation5 + $0x188] sm:$0xff]
    %v138 = vld [vmem:[#allocation5 + $0x190] sm:$0xff]
    %v139 = vld [vmem:[#allocation5 + $0x198] sm:$0xff]
    %v140 = vld [vmem:[#allocation5 + $0x1a0] sm:$0xff]
    %v141 = vld [vmem:[#allocation5 + $0x1a8] sm:$0xff]
    %v142 = vld [vmem:[#allocation5 + $0x1b0] sm:$0xff]
    %v143 = vld [vmem:[#allocation5 + $0x1b8] sm:$0xff]
    %v144 = vld [vmem:[#allocation5 + $0x1c0] sm:$0xff]
    %v145 = vld [vmem:[#allocation5 + $0x1c8] sm:$0xff]
    %v146 = vld [vmem:[#allocation5 + $0x1d0] sm:$0xff]
    %v147 = vld [vmem:[#allocation5 + $0x1d8] sm:$0xff]
    %v148 = vld [vmem:[#allocation5 + $0x1e0] sm:$0xff]
    %v149 = vld [vmem:[#allocation5 + $0x1e8] sm:$0xff]
    %v150 = vld [vmem:[#allocation5 + $0x1f0] sm:$0xff]
    %v151 = vld [vmem:[#allocation5 + $0x1f8] sm:$0xff]
    %v152 = vld [vmem:[#allocation5 + $0x200] sm:$0xff]
    %v153 = vld [vmem:[#allocation5 + $0x208] sm:$0xff]
    %v154 = vld [vmem:[#allocation5 + $0x210] sm:$0xff]
    %v155 = vld [vmem:[#allocation5 + $0x218] sm:$0xff]
    %v156 = vld [vmem:[#allocation5 + $0x220] sm:$0xff]
    %v157 = vld [vmem:[#allocation5 + $0x228] sm:$0xff]
    %v158 = vld [vmem:[#allocation5 + $0x230] sm:$0xff]
    %v159 = vld [vmem:[#allocation5 + $0x238] sm:$0xff]
    %v160 = vld [vmem:[#allocation5 + $0x240] sm:$0xff]
    %v161 = vld [vmem:[#allocation5 + $0x248] sm:$0xff]
    %v162 = vld [vmem:[#allocation5 + $0x250] sm:$0xff]
    %v163 = vld [vmem:[#allocation5 + $0x258] sm:$0xff]
    %v164 = vld [vmem:[#allocation5 + $0x260] sm:$0xff]
    %v165 = vld [vmem:[#allocation5 + $0x268] sm:$0xff]
    %v166 = vld [vmem:[#allocation5 + $0x270] sm:$0xff]
    %v167 = vld [vmem:[#allocation5 + $0x278] sm:$0xff]
    %v168 = vld [vmem:[#allocation5 + $0x280] sm:$0xff]
    %v169 = vld [vmem:[#allocation5 + $0x288] sm:$0xff]
    %v170 = vld [vmem:[#allocation5 + $0x290] sm:$0xff]
    %v171 = vld [vmem:[#allocation5 + $0x298] sm:$0xff]
    %v172 = vld [vmem:[#allocation5 + $0x2a0] sm:$0xff]
    %v173 = vld [vmem:[#allocation5 + $0x2a8] sm:$0xff]
    %v174 = vld [vmem:[#allocation5 + $0x2b0] sm:$0xff]
    %v175 = vld [vmem:[#allocation5 + $0x2b8] sm:$0xff]
    %v176 = vld [vmem:[#allocation5 + $0x2c0] sm:$0xff]
    %v177 = vld [vmem:[#allocation5 + $0x2c8] sm:$0xff]
    %v178 = vld [vmem:[#allocation5 + $0x2d0] sm:$0xff]
    %v179 = vld [vmem:[#allocation5 + $0x2d8] sm:$0xff]
    %v180 = vld [vmem:[#allocation5 + $0x2e0] sm:$0xff]
    %v181 = vld [vmem:[#allocation5 + $0x2e8] sm:$0xff]
    %v182 = vld [vmem:[#allocation5 + $0x2f0] sm:$0xff]
    %v183 = vld [vmem:[#allocation5 + $0x2f8] sm:$0xff]
    %v184 = vld [vmem:[#allocation5 + $0x300] sm:$0xff]
    %v185 = vld [vmem:[#allocation5 + $0x308] sm:$0xff]
    %v186 = vld [vmem:[%s2] sm:$0x1]
    %v188 = vlaneseq
    %v189 = vshrl.u32 %v188, 7
    %v190 = vsub.s32 0, %v189
    %v191 = vrot.slane %v186, %v190
    %vm193 = vcmask 130048
    %v195 = vsel %vm193, %v87, 0
    %197 = vmatprep.subr.mxu0 0.0
    %198 = vmatpush1.msra.mxu0 %v103
    %199 = vmatprep.subr.mxu0 0.0
    %200 = vmatpush1.msra.mxu0 %v102
    %201 = vmatprep.subr.mxu0 0.0
    %202 = vmatpush1.msra.mxu0 %v101
    %203 = vmatprep.subr.mxu0 0.0
    %204 = vmatpush1.msra.mxu0 %v100
    %205 = vmatprep.subr.mxu0 0.0
    %206 = vmatpush1.msra.mxu0 %v99
    %207 = vmatprep.subr.mxu0 0.0
    %208 = vmatpush1.msra.mxu0 %v98
    %209 = vmatprep.subr.mxu0 0.0
    %210 = vmatpush1.msra.mxu0 %v97
    %211 = vmatprep.subr.mxu0 0.0
    %212 = vmatpush1.msra.mxu0 %v96
    %213 = vmatprep.subr.mxu0 0.0
    %214 = vmatpush1.msra.mxu0 %v95
    %215 = vmatprep.subr.mxu0 0.0
    %216 = vmatpush1.msra.mxu0 %v94
    %217 = vmatprep.subr.mxu0 0.0
    %218 = vmatpush1.msra.mxu0 %v93
    %219 = vmatprep.subr.mxu0 0.0
    %220 = vmatpush1.msra.mxu0 %v92
    %221 = vmatprep.subr.mxu0 0.0
    %222 = vmatpush1.msra.mxu0 %v91
    %223 = vmatprep.subr.mxu0 0.0
    %224 = vmatpush1.msra.mxu0 %v90
    %225 = vmatprep.subr.mxu0 0.0
    %226 = vmatpush1.msra.mxu0 %v89
    %227 = vmatprep.subr.mxu0 0.0
    %228 = vmatpush1.msra.mxu0 %v88
    %229 = vmatprep.subr.mxu0 0.0
    %230 = vmatpush2.msra.mxu0 %v119
    %231 = vmatprep.subr.mxu0 0.0
    %232 = vmatpush2.msra.mxu0 %v118
    %233 = vmatprep.subr.mxu0 0.0
    %234 = vmatpush2.msra.mxu0 %v117
    %235 = vmatprep.subr.mxu0 0.0
    %236 = vmatpush2.msra.mxu0 %v116
    %237 = vmatprep.subr.mxu0 0.0
    %238 = vmatpush2.msra.mxu0 %v115
    %239 = vmatprep.subr.mxu0 0.0
    %240 = vmatpush2.msra.mxu0 %v114
    %241 = vmatprep.subr.mxu0 0.0
    %242 = vmatpush2.msra.mxu0 %v113
    %243 = vmatprep.subr.mxu0 0.0
    %244 = vmatpush2.msra.mxu0 %v112
    %245 = vmatprep.subr.mxu0 0.0
    %246 = vmatpush2.msra.mxu0 %v111
    %247 = vmatprep.subr.mxu0 0.0
    %248 = vmatpush2.msra.mxu0 %v110
    %249 = vmatprep.subr.mxu0 0.0
    %250 = vmatpush2.msra.mxu0 %v109
    %251 = vmatprep.subr.mxu0 0.0
    %252 = vmatpush2.msra.mxu0 %v108
    %253 = vmatprep.subr.mxu0 0.0
    %254 = vmatpush2.msra.mxu0 %v107
    %255 = vmatprep.subr.mxu0 0.0
    %256 = vmatpush2.msra.mxu0 %v106
    %257 = vmatprep.subr.mxu0 0.0
    %258 = vmatpush2.msra.mxu0 %v105
    %259 = vmatprep.subr.mxu0 0.0
    %260 = vmatpush2.msra.mxu0 %v104
    %261 = vmatprep.mubr.f32.mxu0 %v82
    %262 = vmatmul.mubr.f32.gmra.mxu0 %v81
    %v263 = vpop.f32.mrf.mxu0
    %v264 = vadd.f32 %v191, %v263
    %v265 = vpop.f32.mrf.mxu0
    %266 = vdwg.mxu0
    %267 = vmatprep.subr.mxu0 0.0
    %268 = vmatpush1.msra.mxu0 %v135
    %269 = vmatprep.subr.mxu0 0.0
    %270 = vmatpush1.msra.mxu0 %v134
    %271 = vmatprep.subr.mxu0 0.0
    %272 = vmatpush1.msra.mxu0 %v133
    %273 = vmatprep.subr.mxu0 0.0
    %274 = vmatpush1.msra.mxu0 %v132
    %275 = vmatprep.subr.mxu0 0.0
    %276 = vmatpush1.msra.mxu0 %v131
    %277 = vmatprep.subr.mxu0 0.0
    %278 = vmatpush1.msra.mxu0 %v130
    %279 = vmatprep.subr.mxu0 0.0
    %280 = vmatpush1.msra.mxu0 %v129
    %281 = vmatprep.subr.mxu0 0.0
    %282 = vmatpush1.msra.mxu0 %v128
    %283 = vmatprep.subr.mxu0 0.0
    %284 = vmatpush1.msra.mxu0 %v127
    %285 = vmatprep.subr.mxu0 0.0
    %286 = vmatpush1.msra.mxu0 %v126
    %287 = vmatprep.subr.mxu0 0.0
    %288 = vmatpush1.msra.mxu0 %v125
    %289 = vmatprep.subr.mxu0 0.0
    %290 = vmatpush1.msra.mxu0 %v124
    %291 = vmatprep.subr.mxu0 0.0
    %292 = vmatpush1.msra.mxu0 %v123
    %293 = vmatprep.subr.mxu0 0.0
    %294 = vmatpush1.msra.mxu0 %v122
    %295 = vmatprep.subr.mxu0 0.0
    %296 = vmatpush1.msra.mxu0 %v121
    %297 = vmatprep.subr.mxu0 0.0
    %298 = vmatpush1.msra.mxu0 %v120
    %299 = vmatprep.subr.mxu0 0.0
    %300 = vmatpush2.msra.mxu0 %v151
    %301 = vmatprep.subr.mxu0 0.0
    %302 = vmatpush2.msra.mxu0 %v150
    %303 = vmatprep.subr.mxu0 0.0
    %304 = vmatpush2.msra.mxu0 %v149
    %305 = vmatprep.subr.mxu0 0.0
    %306 = vmatpush2.msra.mxu0 %v148
    %307 = vmatprep.subr.mxu0 0.0
    %308 = vmatpush2.msra.mxu0 %v147
    %309 = vmatprep.subr.mxu0 0.0
    %310 = vmatpush2.msra.mxu0 %v146
    %311 = vmatprep.subr.mxu0 0.0
    %312 = vmatpush2.msra.mxu0 %v145
    %313 = vmatprep.subr.mxu0 0.0
    %314 = vmatpush2.msra.mxu0 %v144
    %315 = vmatprep.subr.mxu0 0.0
    %316 = vmatpush2.msra.mxu0 %v143
    %317 = vmatprep.subr.mxu0 0.0
    %318 = vmatpush2.msra.mxu0 %v142
    %319 = vmatprep.subr.mxu0 0.0
    %320 = vmatpush2.msra.mxu0 %v141
    %321 = vmatprep.subr.mxu0 0.0
    %322 = vmatpush2.msra.mxu0 %v140
    %323 = vmatprep.subr.mxu0 0.0
    %324 = vmatpush2.msra.mxu0 %v139
    %325 = vmatprep.subr.mxu0 0.0
    %326 = vmatpush2.msra.mxu0 %v138
    %327 = vmatprep.subr.mxu0 0.0
    %328 = vmatpush2.msra.mxu0 %v137
    %329 = vmatprep.subr.mxu0 0.0
    %330 = vmatpush2.msra.mxu0 %v136
    %331 = vmatprep.mubr.f32.mxu0 %v84
    %332 = vmatmul.mubr.f32.gmra.mxu0 %v83
    %v333 = vpop.f32.mrf.mxu0
    %v334 = vadd.f32 %v264, %v333
    %v335 = vpop.f32.mrf.mxu0
    %336 = vdwg.mxu0
    %337 = vmatprep.subr.mxu0 0.0
    %338 = vmatpush1.msra.mxu0 %v167
    %339 = vmatprep.subr.mxu0 0.0
    %340 = vmatpush1.msra.mxu0 %v166
    %341 = vmatprep.subr.mxu0 0.0
    %342 = vmatpush1.msra.mxu0 %v165
    %343 = vmatprep.subr.mxu0 0.0
    %344 = vmatpush1.msra.mxu0 %v164
    %345 = vmatprep.subr.mxu0 0.0
    %346 = vmatpush1.msra.mxu0 %v163
    %347 = vmatprep.subr.mxu0 0.0
    %348 = vmatpush1.msra.mxu0 %v162
    %349 = vmatprep.subr.mxu0 0.0
    %350 = vmatpush1.msra.mxu0 %v161
    %351 = vmatprep.subr.mxu0 0.0
    %352 = vmatpush1.msra.mxu0 %v160
    %353 = vmatprep.subr.mxu0 0.0
    %354 = vmatpush1.msra.mxu0 %v159
    %355 = vmatprep.subr.mxu0 0.0
    %356 = vmatpush1.msra.mxu0 %v158
    %357 = vmatprep.subr.mxu0 0.0
    %358 = vmatpush1.msra.mxu0 %v157
    %359 = vmatprep.subr.mxu0 0.0
    %360 = vmatpush1.msra.mxu0 %v156
    %361 = vmatprep.subr.mxu0 0.0
    %362 = vmatpush1.msra.mxu0 %v155
    %363 = vmatprep.subr.mxu0 0.0
    %364 = vmatpush1.msra.mxu0 %v154
    %365 = vmatprep.subr.mxu0 0.0
    %366 = vmatpush1.msra.mxu0 %v153
    %367 = vmatprep.subr.mxu0 0.0
    %368 = vmatpush1.msra.mxu0 %v152
    %369 = vmatprep.subr.mxu0 0.0
    %370 = vmatpush2.msra.mxu0 %v183
    %371 = vmatprep.subr.mxu0 0.0
    %372 = vmatpush2.msra.mxu0 %v182
    %373 = vmatprep.subr.mxu0 0.0
    %374 = vmatpush2.msra.mxu0 %v181
    %375 = vmatprep.subr.mxu0 0.0
    %376 = vmatpush2.msra.mxu0 %v180
    %377 = vmatprep.subr.mxu0 0.0
    %378 = vmatpush2.msra.mxu0 %v179
    %379 = vmatprep.subr.mxu0 0.0
    %380 = vmatpush2.msra.mxu0 %v178
    %381 = vmatprep.subr.mxu0 0.0
    %382 = vmatpush2.msra.mxu0 %v177
    %383 = vmatprep.subr.mxu0 0.0
    %384 = vmatpush2.msra.mxu0 %v176
    %385 = vmatprep.subr.mxu0 0.0
    %386 = vmatpush2.msra.mxu0 %v175
    %387 = vmatprep.subr.mxu0 0.0
    %388 = vmatpush2.msra.mxu0 %v174
    %389 = vmatprep.subr.mxu0 0.0
    %390 = vmatpush2.msra.mxu0 %v173
    %391 = vmatprep.subr.mxu0 0.0
    %392 = vmatpush2.msra.mxu0 %v172
    %393 = vmatprep.subr.mxu0 0.0
    %394 = vmatpush2.msra.mxu0 %v171
    %395 = vmatprep.subr.mxu0 0.0
    %396 = vmatpush2.msra.mxu0 %v170
    %397 = vmatprep.subr.mxu0 0.0
    %398 = vmatpush2.msra.mxu0 %v169
    %399 = vmatprep.subr.mxu0 0.0
    %400 = vmatpush2.msra.mxu0 %v168
    %401 = vmatprep.mubr.f32.mxu0 %v86
    %402 = vmatmul.mubr.f32.gmra.mxu0 %v85
    %v403 = vpop.f32.mrf.mxu0
    %v404 = vadd.f32 %v334, %v403
    %v405 = vpop.f32.mrf.mxu0
    %406 = vdwg.mxu0
    %407 = vmatprep.subr.mxu0 0.0
    %408 = vmatpush1.msra.mxu0 0.0
    %409 = vmatprep.subr.mxu0 0.0
    %410 = vmatpush1.msra.mxu0 0.0
    %411 = vmatprep.subr.mxu0 0.0
    %412 = vmatpush1.msra.mxu0 0.0
    %413 = vmatprep.subr.mxu0 0.0
    %414 = vmatpush1.msra.mxu0 0.0
    %415 = vmatprep.subr.mxu0 0.0
    %416 = vmatpush1.msra.mxu0 0.0
    %417 = vmatprep.subr.mxu0 0.0
    %418 = vmatpush1.msra.mxu0 0.0
    %419 = vmatprep.subr.mxu0 0.0
    %420 = vmatpush1.msra.mxu0 0.0
    %421 = vmatprep.subr.mxu0 0.0
    %422 = vmatpush1.msra.mxu0 0.0
    %423 = vmatprep.subr.mxu0 0.0
    %424 = vmatpush1.msra.mxu0 0.0
    %425 = vmatprep.subr.mxu0 0.0
    %426 = vmatpush1.msra.mxu0 0.0
    %427 = vmatprep.subr.mxu0 0.0
    %428 = vmatpush1.msra.mxu0 0.0
    %429 = vmatprep.subr.mxu0 0.0
    %430 = vmatpush1.msra.mxu0 0.0
    %431 = vmatprep.subr.mxu0 0.0
    %432 = vmatpush1.msra.mxu0 0.0
    %433 = vmatprep.subr.mxu0 0.0
    %434 = vmatpush1.msra.mxu0 0.0
    %435 = vmatprep.subr.mxu0 0.0
    %436 = vmatpush1.msra.mxu0 %v185
    %437 = vmatprep.subr.mxu0 0.0
    %438 = vmatpush1.msra.mxu0 %v184
    %439 = vmatprep.subr.mxu0 0.0
    %440 = vmatpush2.msra.mxu0 0.0
    %441 = vmatprep.subr.mxu0 0.0
    %442 = vmatpush2.msra.mxu0 0.0
    %443 = vmatprep.subr.mxu0 0.0
    %444 = vmatpush2.msra.mxu0 0.0
    %445 = vmatprep.subr.mxu0 0.0
    %446 = vmatpush2.msra.mxu0 0.0
    %447 = vmatprep.subr.mxu0 0.0
    %448 = vmatpush2.msra.mxu0 0.0
    %449 = vmatprep.subr.mxu0 0.0
    %450 = vmatpush2.msra.mxu0 0.0
    %451 = vmatprep.subr.mxu0 0.0
    %452 = vmatpush2.msra.mxu0 0.0
    %453 = vmatprep.subr.mxu0 0.0
    %454 = vmatpush2.msra.mxu0 0.0
    %455 = vmatprep.subr.mxu0 0.0
    %456 = vmatpush2.msra.mxu0 0.0
    %457 = vmatprep.subr.mxu0 0.0
    %458 = vmatpush2.msra.mxu0 0.0
    %459 = vmatprep.subr.mxu0 0.0
    %460 = vmatpush2.msra.mxu0 0.0
    %461 = vmatprep.subr.mxu0 0.0
    %462 = vmatpush2.msra.mxu0 0.0
    %463 = vmatprep.subr.mxu0 0.0
    %464 = vmatpush2.msra.mxu0 0.0
    %465 = vmatprep.subr.mxu0 0.0
    %466 = vmatpush2.msra.mxu0 0.0
    %467 = vmatprep.subr.mxu0 0.0
    %468 = vmatpush2.msra.mxu0 0.0
    %469 = vmatprep.subr.mxu0 0.0
    %470 = vmatpush2.msra.mxu0 0.0
    %471 = vmatprep.mubr.f32.mxu0 0.0
    %472 = vmatmul.mubr.f32.gmra.mxu0 %v195
    %v473 = vpop.f32.mrf.mxu0
    %v474 = vadd.f32 %v404, %v473
    %v475 = vpop.f32.mrf.mxu0
    %476 = vdwg.mxu0
    %v477 = vmax.f32 %v474, 0.0
    %v478 = vpack.c.bf16 %v477, %v477
    %v479 = vld [vmem:[#allocation7] sm:$0xf]
    %v480 = vld [vmem:[#allocation7 + $0x4] sm:$0xf]
    %v481 = vld [vmem:[#allocation7 + $0x8] sm:$0xf]
    %v482 = vld [vmem:[#allocation7 + $0xc] sm:$0xf]
    %v483 = vld [vmem:[#allocation7 + $0x10] sm:$0xf]
    %v484 = vld [vmem:[#allocation7 + $0x14] sm:$0xf]
    %v485 = vld [vmem:[#allocation7 + $0x18] sm:$0xf]
    %v486 = vld [vmem:[#allocation7 + $0x1c] sm:$0xf]
    %v487 = vld [vmem:[#allocation7 + $0x20] sm:$0xf]
    %v488 = vld [vmem:[#allocation7 + $0x24] sm:$0xf]
    %v489 = vld [vmem:[#allocation7 + $0x28] sm:$0xf]
    %v490 = vld [vmem:[#allocation7 + $0x2c] sm:$0xf]
    %v491 = vld [vmem:[#allocation7 + $0x30] sm:$0xf]
    %v492 = vld [vmem:[#allocation7 + $0x34] sm:$0xf]
    %v493 = vld [vmem:[#allocation7 + $0x38] sm:$0xf]
    %v494 = vld [vmem:[#allocation7 + $0x3c] sm:$0xf]
    %v495 = vld [vmem:[%s4] sm:$0x1]
    %v497 = vlaneseq
    %v498 = vshrl.u32 %v497, 7
    %v499 = vsub.s32 0, %v498
    %v500 = vrot.slane %v495, %v499
    %v518 = vunpack.c.l.b16 %v479
    %v519 = vunpack.c.l.b16 %v480
    %v520 = vunpack.c.l.b16 %v481
    %v521 = vunpack.c.l.b16 %v482
    %v522 = vunpack.c.l.b16 %v483
    %v523 = vunpack.c.l.b16 %v484
    %v524 = vunpack.c.l.b16 %v485
    %v525 = vunpack.c.l.b16 %v486
    %v526 = vunpack.c.l.b16 %v487
    %v527 = vunpack.c.l.b16 %v488
    %v528 = vunpack.c.l.b16 %v489
    %v529 = vunpack.c.l.b16 %v490
    %v530 = vunpack.c.l.b16 %v491
    %v531 = vunpack.c.l.b16 %v492
    %v532 = vunpack.c.l.b16 %v493
    %v533 = vunpack.c.l.b16 %v494
    %v534 = vpack.c.b16 %v519, %v518
    %v535 = vpack.c.b16 %v521, %v520
    %v536 = vpack.c.b16 %v523, %v522
    %v537 = vpack.c.b16 %v525, %v524
    %v538 = vpack.c.b16 %v527, %v526
    %v539 = vpack.c.b16 %v529, %v528
    %v540 = vpack.c.b16 %v531, %v530
    %v541 = vpack.c.b16 %v533, %v532
    %550 = vmatprep.subr.bf16.mxu0 0
    %551 = vmatpush1.bf16.msra.mxu0 %v541
    %552 = vmatprep.subr.bf16.mxu0 0
    %553 = vmatpush1.bf16.msra.mxu0 %v540
    %554 = vmatprep.subr.bf16.mxu0 0
    %555 = vmatpush1.bf16.msra.mxu0 %v539
    %556 = vmatprep.subr.bf16.mxu0 0
    %557 = vmatpush1.bf16.msra.mxu0 %v538
    %558 = vmatprep.subr.bf16.mxu0 0
    %559 = vmatpush1.bf16.msra.mxu0 %v537
    %560 = vmatprep.subr.bf16.mxu0 0
    %561 = vmatpush1.bf16.msra.mxu0 %v536
    %562 = vmatprep.subr.bf16.mxu0 0
    %563 = vmatpush1.bf16.msra.mxu0 %v535
    %564 = vmatprep.subr.bf16.mxu0 0
    %565 = vmatpush1.bf16.msra.mxu0 %v534
    %566 = vmatprep.subr.bf16.mxu0 0
    %567 = vmatpush2.bf16.msra.mxu0 0
    %568 = vmatprep.subr.bf16.mxu0 0
    %569 = vmatpush2.bf16.msra.mxu0 0
    %570 = vmatprep.subr.bf16.mxu0 0
    %571 = vmatpush2.bf16.msra.mxu0 0
    %572 = vmatprep.subr.bf16.mxu0 0
    %573 = vmatpush2.bf16.msra.mxu0 0
    %574 = vmatprep.subr.bf16.mxu0 0
    %575 = vmatpush2.bf16.msra.mxu0 0
    %576 = vmatprep.subr.bf16.mxu0 0
    %577 = vmatpush2.bf16.msra.mxu0 0
    %578 = vmatprep.subr.bf16.mxu0 0
    %579 = vmatpush2.bf16.msra.mxu0 0
    %580 = vmatprep.subr.bf16.mxu0 0
    %581 = vmatpush2.bf16.msra.mxu0 0
    %582 = vmatprep.mubr.bf16.mxu0 0
    %583 = vmatmul.mubr.bf16.gmra.mxu0 %v478
    %v584 = vpop.f32.mrf.mxu0
    %v585 = vadd.f32 %v500, %v584
    %v586 = vpop.f32.mrf.mxu0
    %v587 = vpop.f32.mrf.mxu0
    %v588 = vpop.f32.mrf.mxu0
    %589 = vdwg.mxu0
    %v590 = vmax.f32 %v585, 0.0
    %v591 = vpack.c.bf16 %v590, %v590
    %v592 = vld [vmem:[#allocation8] sm:$0xf]
    %v593 = vld [vmem:[#allocation8 + $0x4] sm:$0xf]
    %v594 = vld [vmem:[#allocation8 + $0x8] sm:$0xf]
    %v595 = vld [vmem:[#allocation8 + $0xc] sm:$0xf]
    %v596 = vld [vmem:[#allocation8 + $0x10] sm:$0xf]
    %v597 = vld [vmem:[#allocation8 + $0x14] sm:$0xf]
    %v598 = vld [vmem:[#allocation8 + $0x18] sm:$0xf]
    %v599 = vld [vmem:[#allocation8 + $0x1c] sm:$0xf]
    %v600 = vld [vmem:[#allocation8 + $0x20] sm:$0xf]
    %v601 = vld [vmem:[#allocation8 + $0x24] sm:$0xf]
    %v602 = vld [vmem:[#allocation8 + $0x28] sm:$0xf]
    %v603 = vld [vmem:[#allocation8 + $0x2c] sm:$0xf]
    %v604 = vld [vmem:[#allocation8 + $0x30] sm:$0xf]
    %v605 = vld [vmem:[#allocation8 + $0x34] sm:$0xf]
    %v606 = vld [vmem:[#allocation8 + $0x38] sm:$0xf]
    %v607 = vld [vmem:[#allocation8 + $0x3c] sm:$0xf]
    %v608 = vld [vmem:[%s6] sm:$0x1]
    %v610 = vlaneseq
    %v611 = vshrl.u32 %v610, 7
    %v612 = vsub.s32 0, %v611
    %v613 = vrot.slane %v608, %v612
    %v631 = vunpack.c.l.b16 %v592
    %v632 = vunpack.c.l.b16 %v593
    %v633 = vunpack.c.l.b16 %v594
    %v634 = vunpack.c.l.b16 %v595
    %v635 = vunpack.c.l.b16 %v596
    %v636 = vunpack.c.l.b16 %v597
    %v637 = vunpack.c.l.b16 %v598
    %v638 = vunpack.c.l.b16 %v599
    %v639 = vunpack.c.l.b16 %v600
    %v640 = vunpack.c.l.b16 %v601
    %v641 = vunpack.c.l.b16 %v602
    %v642 = vunpack.c.l.b16 %v603
    %v643 = vunpack.c.l.b16 %v604
    %v644 = vunpack.c.l.b16 %v605
    %v645 = vunpack.c.l.b16 %v606
    %v646 = vunpack.c.l.b16 %v607
    %v647 = vpack.c.b16 %v632, %v631
    %v648 = vpack.c.b16 %v634, %v633
    %v649 = vpack.c.b16 %v636, %v635
    %v650 = vpack.c.b16 %v638, %v637
    %v651 = vpack.c.b16 %v640, %v639
    %v652 = vpack.c.b16 %v642, %v641
    %v653 = vpack.c.b16 %v644, %v643
    %v654 = vpack.c.b16 %v646, %v645
    %663 = vmatprep.subr.bf16.mxu0 0
    %664 = vmatpush1.bf16.msra.mxu0 %v654
    %665 = vmatprep.subr.bf16.mxu0 0
    %666 = vmatpush1.bf16.msra.mxu0 %v653
    %667 = vmatprep.subr.bf16.mxu0 0
    %668 = vmatpush1.bf16.msra.mxu0 %v652
    %669 = vmatprep.subr.bf16.mxu0 0
    %670 = vmatpush1.bf16.msra.mxu0 %v651
    %671 = vmatprep.subr.bf16.mxu0 0
    %672 = vmatpush1.bf16.msra.mxu0 %v650
    %673 = vmatprep.subr.bf16.mxu0 0
    %674 = vmatpush1.bf16.msra.mxu0 %v649
    %675 = vmatprep.subr.bf16.mxu0 0
    %676 = vmatpush1.bf16.msra.mxu0 %v648
    %677 = vmatprep.subr.bf16.mxu0 0
    %678 = vmatpush1.bf16.msra.mxu0 %v647
    %679 = vmatprep.subr.bf16.mxu0 0
    %680 = vmatpush2.bf16.msra.mxu0 0
    %681 = vmatprep.subr.bf16.mxu0 0
    %682 = vmatpush2.bf16.msra.mxu0 0
    %683 = vmatprep.subr.bf16.mxu0 0
    %684 = vmatpush2.bf16.msra.mxu0 0
    %685 = vmatprep.subr.bf16.mxu0 0
    %686 = vmatpush2.bf16.msra.mxu0 0
    %687 = vmatprep.subr.bf16.mxu0 0
    %688 = vmatpush2.bf16.msra.mxu0 0
    %689 = vmatprep.subr.bf16.mxu0 0
    %690 = vmatpush2.bf16.msra.mxu0 0
    %691 = vmatprep.subr.bf16.mxu0 0
    %692 = vmatpush2.bf16.msra.mxu0 0
    %693 = vmatprep.subr.bf16.mxu0 0
    %694 = vmatpush2.bf16.msra.mxu0 0
    %695 = vmatprep.mubr.bf16.mxu0 0
    %696 = vmatmul.mubr.bf16.gmra.mxu0 %v591
    %v697 = vpop.f32.mrf.mxu0
    %v698 = vadd.f32 %v613, %v697
    %v699 = vpop.f32.mrf.mxu0
    %v700 = vpop.f32.mrf.mxu0
    %v701 = vpop.f32.mrf.mxu0
    %702 = vdwg.mxu0
    %v703 = vpack.c.bf16 %v698, %v698
    %704 = vst [vmem:[#allocation10] sm:$0xf] %v703
    // Predicated region
    $region46: #{tpu_custom_call.1} parent=1 // pred_check
      _
    $region47: #{tpu_custom_call.1} parent=1 // pred_check_branch
      %706 = sbr.rel (0) target = $region49
    $region48: #{tpu_custom_call.1} parent=1 // pred_region
      %s708 = ssub.s32 64, 64
      %709 = vsyncadd [#allocation4], %s708
      %s711 = sshll.u32 [#allocation10], 4
      %s712 = int_to_ptr.vmem [resolvable:$true] %s711
      %714 = dma.vmem_to_hbm [thread:$0]  %s712, 64, %s7, [#allocation4]
    $region49: #{tpu_custom_call.1} parent=1 // pred_fallthru
      _
    // Predicated region
    $region50: #{tpu_custom_call.1} parent=1 // pred_check
      _
    $region51: #{tpu_custom_call.1} parent=1 // pred_check_branch
      %716 = sbr.rel (0) target = $region53
    $region52: #{tpu_custom_call.1} parent=1 // pred_region
      %717 = dma.done [#allocation4], 64
    $region53: #{tpu_custom_call.1} parent=1 // pred_fallthru
      _
    %718 = vsyncpa [#allocation3], 1
    %719 = vsyncpa [#allocation6], 1
    %720 = vsyncpa [#allocation9], 1
    %721 = vsyncpa [#allocation4], 1

</llo_original>
